<compile_context>
chip_gen: v7x
topology: tpu7x:2x2x1
jax: 0.10.0
libtpu: 0.0.40
codegen_flags: <defaults>
</compile_context>

<pallas_src>
import math

import jax
import jax.numpy as jnp
from jax.experimental import pallas as pl
from jax.experimental.pallas import tpu as pltpu


# gelu_tanh(x) = x * 0.5 * (1 + tanh(0.79788456*x*(1 + 0.044715*x^2)))
#             = x * sigmoid(2*0.79788456*x*(1 + 0.044715*x^2))
_C1 = 1.59576912          # 2 * 0.79788456
_C3 = 0.0713548162008     # 2 * 0.79788456 * 0.044715

# Per-block budget expressed as an f32 footprint so the in-kernel f32 upcast
# temporaries are accounted for even when I/O is bf16.
_TARGET_BLOCK_BYTES_F32 = 6 << 20     # ~6 MiB of f32 elements per block
_VMEM_LIMIT_BYTES = 48 << 20          # explicit scoped-VMEM limit (v7x-safe)


def _bias_gelu_kernel(y_ref, b_ref, o_ref):
    # Upcast to f32 for the elementwise math, cast back only at the store.
    x = y_ref[...].astype(jnp.float32) + b_ref[...].astype(jnp.float32)
    inner = x * (_C1 + _C3 * (x * x))                 # folded constants (fewer VALU ops)
    o_ref[...] = (x * jax.nn.sigmoid(inner)).astype(o_ref.dtype)   # sigmoid -> EUP slot


def _fold_factor(rows: int, hidden: int) -> int:
    """Rows-into-lanes fold factor g so that g*hidden % 128 == 0 (exact fold only)."""
    if hidden % 128 == 0:
        return 1
    g = 128 // math.gcd(hidden, 128)
    if g > 1 and rows % g == 0:
        return g
    # TODO(synk): pad the row remainder so narrow-hidden inputs with rows % g != 0
    # also get lane-dense (unmasked) stores; currently they fall back to masked stores.
    return 1


def _choose_hidden_tile(hidden: int, budget_elems: int) -> int:
    """Full hidden unless even a minimal (8, hidden) block exceeds the budget."""
    if 8 * hidden <= budget_elems:
        return hidden
    th = max(128, (budget_elems // (8 * 128)) * 128)
    return min(th, hidden)


def _choose_row_tile(rows: int, hidden_tile: int, budget_elems: int) -> int:
    """Largest multiple-of-8 row tile within the budget, with >=2 blocks when rows>=16."""
    tr = max(8, budget_elems // max(1, hidden_tile))
    tr = (tr // 8) * 8
    if rows >= 16:
        # Guarantee at least two row blocks so megacore (v7x 2xTC) has work on both cores.
        cap = (((rows + 1) // 2 + 7) // 8) * 8
        tr = min(tr, cap)
    if tr >= rows:
        return rows                     # full extent is always a legal block
    return tr


def fused_bias_gelu(inp, bias):
    """inp: (..., hidden), bias: (hidden,). Returns same shape/dtype as inp."""
    orig_shape = inp.shape
    hidden = orig_shape[-1]
    rows = 1
    for d in orig_shape[:-1]:
        rows *= d

    y2d = inp.reshape(rows, hidden)

    # Narrow-hidden path: fold g rows into the lane dimension (exact fold only).
    g = _fold_factor(rows, hidden)
    if g > 1:
        rows_f = rows // g
        hidden_f = hidden * g
        y2d = y2d.reshape(rows_f, hidden_f)
        b2d = jnp.tile(bias, g).reshape(1, hidden_f)
    else:
        rows_f, hidden_f = rows, hidden
        b2d = bias.reshape(1, hidden_f)

    budget_elems = _TARGET_BLOCK_BYTES_F32 // 4
    th = _choose_hidden_tile(hidden_f, budget_elems)
    tr = _choose_row_tile(rows_f, th, budget_elems)

    n_r = pl.cdiv(rows_f, tr)
    n_h = pl.cdiv(hidden_f, th)

    if n_h == 1:
        # Single full-width hidden block: 1-D grid over rows, bias fetched once.
        grid_spec = pltpu.PrefetchScalarGridSpec(
            num_scalar_prefetch=0,
            grid=(n_r,),
            in_specs=[
                pl.BlockSpec((tr, hidden_f), lambda i: (i, 0)),
                pl.BlockSpec((1, hidden_f), lambda i: (0, 0)),
            ],
            out_specs=pl.BlockSpec((tr, hidden_f), lambda i: (i, 0)),
        )
        dim_sem = ("parallel",)
    else:
        # Hidden axis outermost, rows innermost: the bias block index is constant
        # across consecutive (inner) steps, so it is not re-DMA'd every step.
        grid_spec = pltpu.PrefetchScalarGridSpec(
            num_scalar_prefetch=0,
            grid=(n_h, n_r),
            in_specs=[
                pl.BlockSpec((tr, th), lambda j, i: (i, j)),
                pl.BlockSpec((1, th), lambda j, i: (0, j)),
            ],
            out_specs=pl.BlockSpec((tr, th), lambda j, i: (i, j)),
        )
        dim_sem = ("parallel", "parallel")

    out = pl.pallas_call(
        _bias_gelu_kernel,
        out_shape=jax.ShapeDtypeStruct((rows_f, hidden_f), inp.dtype),
        grid_spec=grid_spec,
        compiler_params=pltpu.CompilerParams(
            dimension_semantics=dim_sem,
            vmem_limit_bytes=_VMEM_LIMIT_BYTES,
        ),
    )(y2d, b2d)

    return out.reshape(orig_shape)


if __name__ == "__main__":
    batch, seq, hidden = 2, 8, 32

    key = jax.random.PRNGKey(0)
    k_in, k_bias = jax.random.split(key)

    # Deterministic params: reset_parameters(prev_weight=None) -> uniform in [0, 1)
    bias = jax.random.uniform(k_bias, (hidden,), dtype=jnp.float32, minval=0.0, maxval=1.0)
    x = jax.random.normal(k_in, (batch, seq, hidden), dtype=jnp.float32)

    out = fused_bias_gelu(x, bias)
    jax.block_until_ready(out)

    # Reference (pure JAX) check against the original tanh-approx GELU formula.
    xb = x + bias
    ref = xb * 0.5 * (1.0 + jnp.tanh(0.79788456 * xb * (1.0 + 0.044715 * xb * xb)))
    assert out.shape == x.shape and out.dtype == x.dtype
    assert jnp.allclose(out, ref, atol=1e-5, rtol=1e-5)

    print("KERNEL_OK")
</pallas_src>

<mosaic_0001>
module attributes {stable_mosaic.version = 11 : i64} {
  func.func @_bias_gelu_kernel(%arg0: i32, %arg1: memref<4x128xf32, #tpu.memory_space<vmem>>, %arg2: memref<1x128xf32, #tpu.memory_space<vmem>>, %arg3: memref<4x128xf32, #tpu.memory_space<vmem>>) attributes {dimension_semantics = [#tpu.dimension_semantics<parallel>], iteration_bounds = array<i64: 1>, scalar_prefetch = 0 : i64, scratch_operands = 0 : i64, tpu.core_type = #tpu.core_type<tc>, window_params = [{transform_indices = @transform_0, window_bounds = array<i64: 4, 128>}, {pipeline_mode = #tpu.pipeline_mode<synchronous>, transform_indices = @transform_1, window_bounds = array<i64: 1, 128>}, {transform_indices = @transform_2, window_bounds = array<i64: 4, 128>}]} {
    %c0 = arith.constant 0 : index
    %c0_0 = arith.constant 0 : index
    %0 = vector.load %arg1[%c0, %c0_0] : memref<4x128xf32, #tpu.memory_space<vmem>>, vector<4x128xf32>
    %c0_1 = arith.constant 0 : index
    %c0_2 = arith.constant 0 : index
    %1 = vector.load %arg2[%c0_1, %c0_2] : memref<1x128xf32, #tpu.memory_space<vmem>>, vector<1x128xf32>
    %2 = vector.broadcast %1 : vector<1x128xf32> to vector<4x128xf32>
    %3 = arith.addf %0, %2 : vector<4x128xf32>
    %4 = arith.mulf %3, %3 : vector<4x128xf32>
    %cst = arith.constant 0.0713548139 : f32
    %5 = vector.broadcast %cst : f32 to vector<4x128xf32>
    %6 = arith.mulf %5, %4 : vector<4x128xf32>
    %cst_3 = arith.constant 1.59576917 : f32
    %7 = vector.broadcast %cst_3 : f32 to vector<4x128xf32>
    %8 = arith.addf %7, %6 : vector<4x128xf32>
    %9 = arith.mulf %3, %8 : vector<4x128xf32>
    %10 = arith.negf %9 : vector<4x128xf32>
    %11 = math.exp %10 : vector<4x128xf32>
    %cst_4 = arith.constant 1.000000e+00 : f32
    %12 = vector.broadcast %cst_4 : f32 to vector<4x128xf32>
    %13 = arith.addf %12, %11 : vector<4x128xf32>
    %14 = arith.divf %12, %13 : vector<4x128xf32>
    %15 = arith.mulf %3, %14 : vector<4x128xf32>
    %c0_5 = arith.constant 0 : index
    %c0_6 = arith.constant 0 : index
    %16 = vector.load %arg3[%c0_5, %c0_6] : memref<4x128xf32, #tpu.memory_space<vmem>>, vector<4x128xf32>
    tpu.vector_store %arg3[%c0_5, %c0_6], %15 {strides = array<i32>} : memref<4x128xf32, #tpu.memory_space<vmem>>, vector<4x128xf32>,
    return
  }
  func.func @transform_0(%arg0: i32) -> (i32, i32) {
    %c0_i32 = arith.constant 0 : i32
    %c0_i32_0 = arith.constant 0 : i32
    return %arg0, %c0_i32 : i32, i32
  }
  func.func @transform_1(%arg0: i32) -> (i32, i32) {
    %c0_i32 = arith.constant 0 : i32
    %c0_i32_0 = arith.constant 0 : i32
    %c0_i32_1 = arith.constant 0 : i32
    return %c0_i32, %c0_i32_0 : i32, i32
  }
  func.func @transform_2(%arg0: i32) -> (i32, i32) {
    %c0_i32 = arith.constant 0 : i32
    %c0_i32_0 = arith.constant 0 : i32
    return %arg0, %c0_i32 : i32, i32
  }
}

</mosaic_0001>

<llo_original>
// kernel: tpu_custom_call.1
$region0: #{tpu_custom_call.1}
  #allocation0 [shape = 'u32[]', space=smem, size = 0x4, offset = 0x4, fixed_abs, tag = 'smem constant byte address 0x4 - core index']
  #allocation1 [shape = 'u32[144,128]{1,0:T(1,128)}', space=vmem, size = 0x12000, scoped, tag = 'internal scratch']
  %s0 = inlined_call_operand.hbm [shape: f32[4,128], index: 0, kind: input, shape index: {}]
  %s1 = inlined_call_operand.vmem [shape: f32[1,128], index: 1, kind: input, shape index: {}]
  %s2 = inlined_call_operand.hbm [shape: f32[4,128], index: 2, kind: output, shape index: {}]
  %s3 = sld [smem:[#allocation0]]
  $region22: #{tpu_custom_call.1} parent=0
    _
  %s5 = ssub.s32 1, %s3
  %s6 = scalar_select 0, %s5, %s3
  $region1: #{tpu_custom_call.1} parent=0
    #allocation2 [shape = 'u8[2048]{0}', space=vmem, size = 0x800, scoped, tag = 'input window, operand 0, single buffered']
    #allocation3 [shape = 's32[1]{0}', space=sflag, size = 0x4, scoped, tag = 'scoped memory for tpu_custom_call.1']
    #allocation4 [shape = 's32[1]{0}', space=sflag, size = 0x4, scoped, tag = 'scoped memory for tpu_custom_call.1']
    #allocation5 [shape = 'u8[2048]{0}', space=vmem, size = 0x800, scoped, tag = 'output window, operand 0, single buffered']
    %7 = vsyncpa [#allocation3], 0
    %8 = vsyncpa [#allocation4], 0
    // Predicated region
    $region2: #{tpu_custom_call.1} parent=1 // pred_check
      _
    $region3: #{tpu_custom_call.1} parent=1 // pred_check_branch
      %10 = sbr.rel (0) target = $region5
    $region4: #{tpu_custom_call.1} parent=1 // pred_region
      %s12 = ssub.s32 64, 64
      %13 = vsyncadd [#allocation3], %s12
      %s15 = sshll.u32 [#allocation2], 4
      %s16 = int_to_ptr.vmem [resolvable:$true] %s15
      %18 = dma.hbm_to_vmem [thread:$0]  %s0, 64, %s16, [#allocation3]
    $region5: #{tpu_custom_call.1} parent=1 // pred_fallthru
      _
    // Predicated region
    $region6: #{tpu_custom_call.1} parent=1 // pred_check
      _
    $region7: #{tpu_custom_call.1} parent=1 // pred_check_branch
      %20 = sbr.rel (0) target = $region9
    $region8: #{tpu_custom_call.1} parent=1 // pred_region
      _
    $region9: #{tpu_custom_call.1} parent=1 // pred_fallthru
      _
    // Predicated region
    $region10: #{tpu_custom_call.1} parent=1 // pred_check
      _
    $region11: #{tpu_custom_call.1} parent=1 // pred_check_branch
      %22 = sbr.rel (0) target = $region13
    $region12: #{tpu_custom_call.1} parent=1 // pred_region
      %23 = dma.done [#allocation3], 64
    $region13: #{tpu_custom_call.1} parent=1 // pred_fallthru
      _
    %v24 = vld [vmem:[#allocation2] sm:$0xf]
    %v25 = vld [vmem:[%s1] sm:$0x1]
    %v27 = vlaneseq
    %v28 = vshrl.u32 %v27, 7
    %v29 = vsub.s32 0, %v28
    %v30 = vrot.slane %v25, %v29
    %v32 = vadd.f32 %v24, %v30
    %v33 = vmul.f32 %v32, %v32
    %v34 = vmul.f32 %v33, 0.071354814
    %v35 = vadd.f32 %v34, 1.5957692
    %v36 = vmul.f32 %v32, %v35
    %v37 = vxor.u32 %v36, 2147483648
    %v38 = vmul.f32 %v37, 1.442695
    %v39 = vpow.pop %v38
    %v40 = vadd.f32 %v39, 1.0
    %v41 = vrcp.pop %v40
    %v42 = vmul.f32 1.0, %v41
    %v43 = vmul.f32 %v32, %v42
    %44 = vst [vmem:[#allocation5] sm:$0xf] %v43
    // Predicated region
    $region14: #{tpu_custom_call.1} parent=1 // pred_check
      _
    $region15: #{tpu_custom_call.1} parent=1 // pred_check_branch
      %46 = sbr.rel (0) target = $region17
    $region16: #{tpu_custom_call.1} parent=1 // pred_region
      %s48 = ssub.s32 64, 64
      %49 = vsyncadd [#allocation4], %s48
      %s51 = sshll.u32 [#allocation5], 4
      %s52 = int_to_ptr.vmem [resolvable:$true] %s51
      %54 = dma.vmem_to_hbm [thread:$0]  %s52, 64, %s2, [#allocation4]
    $region17: #{tpu_custom_call.1} parent=1 // pred_fallthru
      _
    // Predicated region
    $region18: #{tpu_custom_call.1} parent=1 // pred_check
      _
    $region19: #{tpu_custom_call.1} parent=1 // pred_check_branch
      %56 = sbr.rel (0) target = $region21
    $region20: #{tpu_custom_call.1} parent=1 // pred_region
      %57 = dma.done [#allocation4], 64
    $region21: #{tpu_custom_call.1} parent=1 // pred_fallthru
      _
    %58 = vsyncpa [#allocation3], 1
    %59 = vsyncpa [#allocation4], 1

</llo_original>
